<compile_context>
chip_gen: v7x
topology: tpu7x:2x2x1
jax: 0.10.0
libtpu: 0.0.40
codegen_flags: <defaults>
</compile_context>

<pallas_src>
import functools

import jax
import jax.numpy as jnp
from jax.experimental import pallas as pl
from jax.experimental.pallas import tpu as pltpu


# ---------------------------------------------------------------------------
# Kernels
# ---------------------------------------------------------------------------
def _bn_stats_scale_kernel(x_ref, g_ref, b_ref, scale_ref, shift_ref,
                           sum_ref, sumsq_ref, *, eps, inv_count):
    """Accumulate per-channel sum / sumsq over row tiles; on the final grid
    step emit the fused affine parameters (scale, shift) for the apply pass."""
    @pl.when(pl.program_id(0) == 0)
    def _init():
        sum_ref[...] = jnp.zeros_like(sum_ref)
        sumsq_ref[...] = jnp.zeros_like(sumsq_ref)

    x = x_ref[...].astype(jnp.float32)
    sum_ref[...] += jnp.sum(x, axis=0, keepdims=True)
    sumsq_ref[...] += jnp.sum(x * x, axis=0, keepdims=True)

    @pl.when(pl.program_id(0) == pl.num_programs(0) - 1)
    def _finalize():
        mean = sum_ref[...] * inv_count
        var = jnp.maximum(sumsq_ref[...] * inv_count - mean * mean, 0.0)
        inv_std = jax.lax.rsqrt(var + eps)
        scale = g_ref[...] * inv_std          # (1, C)
        scale_ref[...] = scale
        shift_ref[...] = b_ref[...] - mean * scale


def _bn_apply_kernel(x_ref, scale_ref, shift_ref, o_ref):
    """Pure fused affine epilogue: y = x * scale + shift."""
    x = x_ref[...].astype(jnp.float32)
    o_ref[...] = (x * scale_ref[...] + shift_ref[...]).astype(o_ref.dtype)


# ---------------------------------------------------------------------------
# Wrapper
# ---------------------------------------------------------------------------
def _row_tiling(m, c, itemsize, max_tile_bytes):
    """Pick (tile_rows, padded_rows, num_tiles): rows multiple of 8, tile bytes bounded."""
    cap_rows = max(8, (max_tile_bytes // max(1, c * itemsize)) // 8 * 8)
    n_tiles = max(1, -(-m // cap_rows))
    tm = -(-m // n_tiles)
    tm = ((tm + 7) // 8) * 8
    return tm, tm * n_tiles, n_tiles


def batchnorm_forward(x, gamma, beta, *, eps=1e-5, training=True,
                      running_mean=None, running_var=None,
                      max_tile_bytes=4 * 1024 * 1024):
    """BatchNorm over the last dim of x (= transpose -> BatchNorm1d -> transpose)."""
    orig_shape = x.shape
    c = orig_shape[-1]
    x2 = x.reshape(-1, c)
    m = x2.shape[0]

    tm, m_pad, n_tiles = _row_tiling(m, c, jnp.dtype(x.dtype).itemsize, max_tile_bytes)
    x2p = jnp.pad(x2, ((0, m_pad - m), (0, 0))) if m_pad != m else x2

    g = gamma.reshape(1, c).astype(jnp.float32)
    b = beta.reshape(1, c).astype(jnp.float32)

    row_spec = pl.BlockSpec((tm, c), lambda i: (i, 0))
    chan_spec = pl.BlockSpec((1, c), lambda i: (0, 0))

    if training:
        # Pass 1: per-channel reduction over all rows; emits fused (scale, shift).
        scale, shift = pl.pallas_call(
            functools.partial(_bn_stats_scale_kernel, eps=eps,
                              inv_count=1.0 / float(m)),
            grid=(n_tiles,),
            in_specs=[row_spec, chan_spec, chan_spec],
            out_specs=[chan_spec, chan_spec],
            out_shape=[jax.ShapeDtypeStruct((1, c), jnp.float32),
                       jax.ShapeDtypeStruct((1, c), jnp.float32)],
            scratch_shapes=[pltpu.VMEM((1, c), jnp.float32),
                            pltpu.VMEM((1, c), jnp.float32)],
            compiler_params=pltpu.CompilerParams(
                dimension_semantics=("arbitrary",)),
        )(x2p, g, b)
        # TODO(synk): running_mean/running_var momentum update is a training-time
        # buffer side effect and does not affect the returned forward value.
    else:
        # Eval mode: O(C) derivation from running statistics, done in plain JAX.
        rm = running_mean.reshape(1, c).astype(jnp.float32)
        rv = running_var.reshape(1, c).astype(jnp.float32)
        scale = g * jax.lax.rsqrt(rv + eps)
        shift = b - rm * scale

    # Pass 2: fused normalise + affine (single FMA), row-parallel grid.
    y = pl.pallas_call(
        _bn_apply_kernel,
        grid=(n_tiles,),
        in_specs=[row_spec, chan_spec, chan_spec],
        out_specs=row_spec,
        out_shape=jax.ShapeDtypeStruct((m_pad, c), x.dtype),
        compiler_params=pltpu.CompilerParams(
            dimension_semantics=("parallel",)),
    )(x2p, scale, shift)

    if m_pad != m:
        y = y[:m]
    return y.reshape(orig_shape)


# ---------------------------------------------------------------------------
if __name__ == "__main__":
    B, L, C = 2, 256, 128
    key = jax.random.PRNGKey(0)
    kx, kg, kb, km, kv = jax.random.split(key, 5)
    x = jax.random.normal(kx, (B, L, C), jnp.float32)
    gamma = 1.0 + 0.1 * jax.random.normal(kg, (C,), jnp.float32)
    beta = 0.1 * jax.random.normal(kb, (C,), jnp.float32)

    # Small tile budget to exercise the multi-tile reduction / pipelined grid.
    y = batchnorm_forward(x, gamma, beta, max_tile_bytes=32 * 1024)
    y = jax.block_until_ready(y)

    # Pure-JAX reference: training-mode BatchNorm1d over the feature (last) dim.
    x2 = x.reshape(-1, C)
    mean = x2.mean(axis=0)
    var = x2.var(axis=0)  # biased variance, as used for normalisation in training
    ref = ((x2 - mean) * jax.lax.rsqrt(var + 1e-5) * gamma + beta).reshape(B, L, C)
    assert y.shape == x.shape, y.shape
    err = float(jnp.max(jnp.abs(y - ref)))
    assert err < 1e-4, f"training-mode max abs err {err}"

    # Eval-mode path (running statistics), same fused apply kernel.
    rmean = 0.05 * jax.random.normal(km, (C,), jnp.float32)
    rvar = 1.0 + 0.1 * jax.random.normal(kv, (C,), jnp.float32) ** 2
    ye = batchnorm_forward(x, gamma, beta, training=False,
                           running_mean=rmean, running_var=rvar)
    ye = jax.block_until_ready(ye)
    refe = ((x2 - rmean) * jax.lax.rsqrt(rvar + 1e-5) * gamma + beta).reshape(B, L, C)
    erre = float(jnp.max(jnp.abs(ye - refe)))
    assert erre < 1e-4, f"eval-mode max abs err {erre}"

    print("KERNEL_OK")
</pallas_src>

<mosaic_0001>
module attributes {stable_mosaic.version = 11 : i64} {
  func.func @_bn_stats_scale_kernel(%arg0: i32, %arg1: memref<64x128xf32, #tpu.memory_space<vmem>>, %arg2: memref<1x128xf32, #tpu.memory_space<vmem>>, %arg3: memref<1x128xf32, #tpu.memory_space<vmem>>, %arg4: memref<1x128xf32, #tpu.memory_space<vmem>>, %arg5: memref<1x128xf32, #tpu.memory_space<vmem>>, %arg6: memref<1x128xf32, #tpu.memory_space<vmem>>, %arg7: memref<1x128xf32, #tpu.memory_space<vmem>>) attributes {dimension_semantics = [#tpu.dimension_semantics<arbitrary>], iteration_bounds = array<i64: 8>, scalar_prefetch = 0 : i64, scratch_operands = 2 : i64, tpu.core_type = #tpu.core_type<tc>, window_params = [{transform_indices = @transform_0, window_bounds = array<i64: 64, 128>}, {pipeline_mode = #tpu.pipeline_mode<synchronous>, transform_indices = @transform_1, window_bounds = array<i64: 1, 128>}, {pipeline_mode = #tpu.pipeline_mode<synchronous>, transform_indices = @transform_2, window_bounds = array<i64: 1, 128>}, {pipeline_mode = #tpu.pipeline_mode<synchronous>, transform_indices = @transform_3, window_bounds = array<i64: 1, 128>}, {pipeline_mode = #tpu.pipeline_mode<synchronous>, transform_indices = @transform_4, window_bounds = array<i64: 1, 128>}]} {
    %c0_i32 = arith.constant 0 : i32
    %0 = arith.cmpi eq, %arg0, %c0_i32 : i32
    %1 = arith.extui %0 : i1 to i32
    %c0_i32_0 = arith.constant 0 : i32
    %2 = arith.cmpi ne, %1, %c0_i32_0 : i32
    scf.if %2 {
      %cst_12 = arith.constant 0.000000e+00 : f32
      %18 = vector.broadcast %cst_12 : f32 to vector<1x128xf32>
      %c0_13 = arith.constant 0 : index
      %c0_14 = arith.constant 0 : index
      %19 = vector.load %arg6[%c0_13, %c0_14] : memref<1x128xf32, #tpu.memory_space<vmem>>, vector<1x128xf32>
      tpu.vector_store %arg6[%c0_13, %c0_14], %18 {strides = array<i32>} : memref<1x128xf32, #tpu.memory_space<vmem>>, vector<1x128xf32>,
      %cst_15 = arith.constant 0.000000e+00 : f32
      %20 = vector.broadcast %cst_15 : f32 to vector<1x128xf32>
      %c0_16 = arith.constant 0 : index
      %c0_17 = arith.constant 0 : index
      %21 = vector.load %arg7[%c0_16, %c0_17] : memref<1x128xf32, #tpu.memory_space<vmem>>, vector<1x128xf32>
      tpu.vector_store %arg7[%c0_16, %c0_17], %20 {strides = array<i32>} : memref<1x128xf32, #tpu.memory_space<vmem>>, vector<1x128xf32>,
    } else {
    }
    %c0 = arith.constant 0 : index
    %c0_1 = arith.constant 0 : index
    %3 = vector.load %arg1[%c0, %c0_1] : memref<64x128xf32, #tpu.memory_space<vmem>>, vector<64x128xf32>
    %c0_2 = arith.constant 0 : index
    %c0_3 = arith.constant 0 : index
    %4 = vector.load %arg6[%c0_2, %c0_3] : memref<1x128xf32, #tpu.memory_space<vmem>>, vector<1x128xf32>
    %cst = arith.constant dense<0.000000e+00> : vector<128xf32>
    %5 = vector.multi_reduction <add>, %3, %cst [0] : vector<64x128xf32> to vector<128xf32>
    %6 = vector.shape_cast %5 : vector<128xf32> to vector<1x128xf32>
    %7 = arith.addf %4, %6 : vector<1x128xf32>
    %c0_4 = arith.constant 0 : index
    %c0_5 = arith.constant 0 : index
    %8 = vector.load %arg6[%c0_4, %c0_5] : memref<1x128xf32, #tpu.memory_space<vmem>>, vector<1x128xf32>
    tpu.vector_store %arg6[%c0_4, %c0_5], %7 {strides = array<i32>} : memref<1x128xf32, #tpu.memory_space<vmem>>, vector<1x128xf32>,
    %c0_6 = arith.constant 0 : index
    %c0_7 = arith.constant 0 : index
    %9 = vector.load %arg7[%c0_6, %c0_7] : memref<1x128xf32, #tpu.memory_space<vmem>>, vector<1x128xf32>
    %10 = arith.mulf %3, %3 : vector<64x128xf32>
    %cst_8 = arith.constant dense<0.000000e+00> : vector<128xf32>
    %11 = vector.multi_reduction <add>, %10, %cst_8 [0] : vector<64x128xf32> to vector<128xf32>
    %12 = vector.shape_cast %11 : vector<128xf32> to vector<1x128xf32>
    %13 = arith.addf %9, %12 : vector<1x128xf32>
    %c0_9 = arith.constant 0 : index
    %c0_10 = arith.constant 0 : index
    %14 = vector.load %arg7[%c0_9, %c0_10] : memref<1x128xf32, #tpu.memory_space<vmem>>, vector<1x128xf32>
    tpu.vector_store %arg7[%c0_9, %c0_10], %13 {strides = array<i32>} : memref<1x128xf32, #tpu.memory_space<vmem>>, vector<1x128xf32>,
    %c7_i32 = arith.constant 7 : i32
    %15 = arith.cmpi eq, %arg0, %c7_i32 : i32
    %16 = arith.extui %15 : i1 to i32
    %c0_i32_11 = arith.constant 0 : i32
    %17 = arith.cmpi ne, %16, %c0_i32_11 : i32
    scf.if %17 {
      %c0_12 = arith.constant 0 : index
      %c0_13 = arith.constant 0 : index
      %18 = vector.load %arg6[%c0_12, %c0_13] : memref<1x128xf32, #tpu.memory_space<vmem>>, vector<1x128xf32>
      %cst_14 = arith.constant 0.001953125 : f32
      %19 = vector.broadcast %cst_14 : f32 to vector<1x128xf32>
      %20 = arith.mulf %18, %19 : vector<1x128xf32>
      %c0_15 = arith.constant 0 : index
      %c0_16 = arith.constant 0 : index
      %21 = vector.load %arg7[%c0_15, %c0_16] : memref<1x128xf32, #tpu.memory_space<vmem>>, vector<1x128xf32>
      %cst_17 = arith.constant 0.001953125 : f32
      %22 = vector.broadcast %cst_17 : f32 to vector<1x128xf32>
      %23 = arith.mulf %21, %22 : vector<1x128xf32>
      %24 = arith.mulf %20, %20 : vector<1x128xf32>
      %25 = arith.subf %23, %24 : vector<1x128xf32>
      %cst_18 = arith.constant 0.000000e+00 : f32
      %26 = vector.broadcast %cst_18 : f32 to vector<1x128xf32>
      %27 = arith.maximumf %25, %26 : vector<1x128xf32>
      %cst_19 = arith.constant 9.99999974E-6 : f32
      %28 = vector.broadcast %cst_19 : f32 to vector<1x128xf32>
      %29 = arith.addf %27, %28 : vector<1x128xf32>
      %30 = math.rsqrt %29 : vector<1x128xf32>
      %c0_20 = arith.constant 0 : index
      %c0_21 = arith.constant 0 : index
      %31 = vector.load %arg2[%c0_20, %c0_21] : memref<1x128xf32, #tpu.memory_space<vmem>>, vector<1x128xf32>
      %32 = arith.mulf %31, %30 : vector<1x128xf32>
      %c0_22 = arith.constant 0 : index
      %c0_23 = arith.constant 0 : index
      %33 = vector.load %arg4[%c0_22, %c0_23] : memref<1x128xf32, #tpu.memory_space<vmem>>, vector<1x128xf32>
      tpu.vector_store %arg4[%c0_22, %c0_23], %32 {strides = array<i32>} : memref<1x128xf32, #tpu.memory_space<vmem>>, vector<1x128xf32>,
      %c0_24 = arith.constant 0 : index
      %c0_25 = arith.constant 0 : index
      %34 = vector.load %arg3[%c0_24, %c0_25] : memref<1x128xf32, #tpu.memory_space<vmem>>, vector<1x128xf32>
      %35 = arith.mulf %20, %32 : vector<1x128xf32>
      %36 = arith.subf %34, %35 : vector<1x128xf32>
      %c0_26 = arith.constant 0 : index
      %c0_27 = arith.constant 0 : index
      %37 = vector.load %arg5[%c0_26, %c0_27] : memref<1x128xf32, #tpu.memory_space<vmem>>, vector<1x128xf32>
      tpu.vector_store %arg5[%c0_26, %c0_27], %36 {strides = array<i32>} : memref<1x128xf32, #tpu.memory_space<vmem>>, vector<1x128xf32>,
    } else {
    }
    return
  }
  func.func @transform_0(%arg0: i32) -> (i32, i32) {
    %c0_i32 = arith.constant 0 : i32
    %c0_i32_0 = arith.constant 0 : i32
    return %arg0, %c0_i32 : i32, i32
  }
  func.func @transform_1(%arg0: i32) -> (i32, i32) {
    %c0_i32 = arith.constant 0 : i32
    %c0_i32_0 = arith.constant 0 : i32
    %c0_i32_1 = arith.constant 0 : i32
    return %c0_i32, %c0_i32_0 : i32, i32
  }
  func.func @transform_2(%arg0: i32) -> (i32, i32) {
    %c0_i32 = arith.constant 0 : i32
    %c0_i32_0 = arith.constant 0 : i32
    %c0_i32_1 = arith.constant 0 : i32
    return %c0_i32, %c0_i32_0 : i32, i32
  }
  func.func @transform_3(%arg0: i32) -> (i32, i32) {
    %c0_i32 = arith.constant 0 : i32
    %c0_i32_0 = arith.constant 0 : i32
    %c0_i32_1 = arith.constant 0 : i32
    return %c0_i32, %c0_i32_0 : i32, i32
  }
  func.func @transform_4(%arg0: i32) -> (i32, i32) {
    %c0_i32 = arith.constant 0 : i32
    %c0_i32_0 = arith.constant 0 : i32
    %c0_i32_1 = arith.constant 0 : i32
    return %c0_i32, %c0_i32_0 : i32, i32
  }
}

</mosaic_0001>

<llo_original>
// kernel: tpu_custom_call.1
$region0: #{tpu_custom_call.1}
  #allocation0 [shape = 'u32[]', space=smem, size = 0x4, offset = 0x4, fixed_abs, tag = 'smem constant byte address 0x4 - core index']
  #allocation1 [shape = 'u32[144,128]{1,0:T(1,128)}', space=vmem, size = 0x12000, scoped, tag = 'internal scratch']
  #allocation2 [shape = 'f32[1,128]{1,0:T(1,128)}', space=vmem, size = 0x200, scoped, tag = 'scratch operand']
  #allocation3 [shape = 'f32[1,128]{1,0:T(1,128)}', space=vmem, size = 0x200, scoped, tag = 'scratch operand']
  %s0 = inlined_call_operand.hbm [shape: f32[512,128], index: 0, kind: input, shape index: {}]
  %s1 = inlined_call_operand.vmem [shape: f32[1,128], index: 1, kind: input, shape index: {}]
  %s2 = inlined_call_operand.vmem [shape: f32[1,128], index: 2, kind: input, shape index: {}]
  %s3 = inlined_call_operand.hbm [shape: f32[1,128], index: 3, kind: output, shape index: {0}]
  %s4 = inlined_call_operand.hbm [shape: f32[1,128], index: 4, kind: output, shape index: {1}]
  %5 = xla_tuple %s3, %s4
  %s6 = sld [smem:[#allocation0]]
  $region65: #{tpu_custom_call.1} parent=0
    _
  %s8 = ssub.s32 1, %s6
  %s9 = scalar_select 0, %s8, %s6
  $region1: #{tpu_custom_call.1} parent=0
    #allocation4 [shape = 'u8[65536]{0}', space=vmem, size = 0x10000, scoped, tag = 'input window, operand 0']
    #allocation5 [shape = 's32[2]{0}', space=sflag, size = 0x8, scoped, tag = 'scoped memory for tpu_custom_call.1']
    #allocation6 [shape = 's32[2]{0}', space=sflag, size = 0x8, scoped, tag = 'scoped memory for tpu_custom_call.1']
    #allocation7 [shape = 'u8[512]{0}', space=vmem, size = 0x400, scoped, tag = 'output window, operand 0, single buffered']
    #allocation8 [shape = 'u8[512]{0}', space=vmem, size = 0x400, scoped, tag = 'output window, operand 1, single buffered']
    #allocation9 [shape = 's32[1]{0}', space=sflag, size = 0x4, scoped, tag = 'scoped memory for tpu_custom_call.1']
    %10 = vsyncpa [#allocation5], 0
    %s11 = scalar_lea.sflag [#allocation5], 1
    %12 = vsyncpa %s11, 0
    %13 = vsyncpa [#allocation6], 0
    %14 = vsyncpa [#allocation9], 0
    loop: start=0, step=1, limit=10
    $region2: #{tpu_custom_call.1} parent=1 // loop_pre_header
      _
    $region3: #{tpu_custom_call.1} parent=1 // loop_header
      %s16 = sphi 0, %s20
      %p17 = scmp.ge.s32.totalorder %s16, 10
      %s26 = sphi 0, %s28
      %s29 = sphi 0, %s26
      %s30 = sphi 0, %s29
      %s46 = sphi 0, %s30
      %s50 = sphi 0, %s50
      %s52 = sphi 0, %s50
      %s53 = sphi 0, %s52
      %s67 = sphi 0, %s53
      %s71 = sphi 0, %s71
      %s73 = sphi 0, %s71
      %s74 = sphi 0, %s73
      %s88 = sphi 0, %s74
      %s92 = sphi 0, %s92
      %s94 = sphi 0, %s92
      %s95 = sphi 0, %s94
      %s109 = sphi 0, %s95
      %s113 = sphi 0, %s113
      %s115 = sphi 0, %s113
      %s116 = sphi 0, %s115
      %s130 = sphi 0, %s116
    $region4: #{tpu_custom_call.1} parent=1 // loop_header_branch
      %19 = sbr.rel (%p17) target = $region8
    $region5: #{tpu_custom_call.1} parent=1 // loop_body
      %s21 = ssub.s32 %s16, 1
      %s22 = ssub.s32 %s16, 2
      %s23 = sadd.s32 %s16, 1
      %s24 = ssub.s32 %s16, %s23
      %p25 = scmp.eq.s32.totalorder %s24, 0
      %s27 = sadd.s32 %s26, 1
      %s28 = scalar_select %p25, %s26, %s27
      %p31 = pneg %p25
      %p32 = scmp.eq.s32.totalorder %s16, 7
      %p33 = por %p31, %p32
      %p34 = scmp.ne.s32.totalorder %s26, %s29
      %p35 = scmp.eq.s32.totalorder %s16, 0
      %p36 = por %p34, %p35
      %p37 = scmp.ne.s32.totalorder %s26, %s29
      %p38 = scmp.eq.s32.totalorder %s21, 7
      %p39 = por %p37, %p38
      %p40 = scmp.ne.s32.totalorder %s29, %s30
      %p41 = scmp.eq.s32.totalorder %s21, 0
      %p42 = por %p40, %p41
      %p43 = scmp.ne.s32.totalorder %s29, %s30
      %p44 = scmp.eq.s32.totalorder %s22, 7
      %p45 = por %p43, %p44
      %p47 = scmp.ne.s32.totalorder %s30, %s46
      %p48 = scmp.eq.s32.totalorder %s22, 0
      %p49 = por %p47, %p48
      %s51 = sadd.s32 %s50, 1
      %p54 = scmp.eq.s32.totalorder %s16, 7
      %p55 = scmp.ne.s32.totalorder %s50, %s52
      %p56 = scmp.eq.s32.totalorder %s16, 0
      %p57 = por %p55, %p56
      %p58 = scmp.ne.s32.totalorder %s50, %s52
      %p59 = scmp.eq.s32.totalorder %s21, 7
      %p60 = por %p58, %p59
      %p61 = scmp.ne.s32.totalorder %s52, %s53
      %p62 = scmp.eq.s32.totalorder %s21, 0
      %p63 = por %p61, %p62
      %p64 = scmp.ne.s32.totalorder %s52, %s53
      %p65 = scmp.eq.s32.totalorder %s22, 7
      %p66 = por %p64, %p65
      %p68 = scmp.ne.s32.totalorder %s53, %s67
      %p69 = scmp.eq.s32.totalorder %s22, 0
      %p70 = por %p68, %p69
      %s72 = sadd.s32 %s71, 1
      %p75 = scmp.eq.s32.totalorder %s16, 7
      %p76 = scmp.ne.s32.totalorder %s71, %s73
      %p77 = scmp.eq.s32.totalorder %s16, 0
      %p78 = por %p76, %p77
      %p79 = scmp.ne.s32.totalorder %s71, %s73
      %p80 = scmp.eq.s32.totalorder %s21, 7
      %p81 = por %p79, %p80
      %p82 = scmp.ne.s32.totalorder %s73, %s74
      %p83 = scmp.eq.s32.totalorder %s21, 0
      %p84 = por %p82, %p83
      %p85 = scmp.ne.s32.totalorder %s73, %s74
      %p86 = scmp.eq.s32.totalorder %s22, 7
      %p87 = por %p85, %p86
      %p89 = scmp.ne.s32.totalorder %s74, %s88
      %p90 = scmp.eq.s32.totalorder %s22, 0
      %p91 = por %p89, %p90
      %s93 = sadd.s32 %s92, 1
      %p96 = scmp.eq.s32.totalorder %s16, 7
      %p97 = scmp.ne.s32.totalorder %s92, %s94
      %p98 = scmp.eq.s32.totalorder %s16, 0
      %p99 = por %p97, %p98
      %p100 = scmp.ne.s32.totalorder %s92, %s94
      %p101 = scmp.eq.s32.totalorder %s21, 7
      %p102 = por %p100, %p101
      %p103 = scmp.ne.s32.totalorder %s94, %s95
      %p104 = scmp.eq.s32.totalorder %s21, 0
      %p105 = por %p103, %p104
      %p106 = scmp.ne.s32.totalorder %s94, %s95
      %p107 = scmp.eq.s32.totalorder %s22, 7
      %p108 = por %p106, %p107
      %p110 = scmp.ne.s32.totalorder %s95, %s109
      %p111 = scmp.eq.s32.totalorder %s22, 0
      %p112 = por %p110, %p111
      %s114 = sadd.s32 %s113, 1
      %p117 = scmp.eq.s32.totalorder %s16, 7
      %p118 = scmp.ne.s32.totalorder %s113, %s115
      %p119 = scmp.eq.s32.totalorder %s16, 0
      %p120 = por %p118, %p119
      %p121 = scmp.ne.s32.totalorder %s113, %s115
      %p122 = scmp.eq.s32.totalorder %s21, 7
      %p123 = por %p121, %p122
      %p124 = scmp.ne.s32.totalorder %s115, %s116
      %p125 = scmp.eq.s32.totalorder %s21, 0
      %p126 = por %p124, %p125
      %p127 = scmp.ne.s32.totalorder %s115, %s116
      %p128 = scmp.eq.s32.totalorder %s22, 7
      %p129 = por %p127, %p128
      %p131 = scmp.ne.s32.totalorder %s116, %s130
      %p132 = scmp.eq.s32.totalorder %s22, 0
      %p133 = por %p131, %p132
      %p134 = scmp.le.s32.totalorder 1, %s16
      %p135 = scmp.lt.s32.totalorder %s16, 9
      %p136 = pnand %p134, %p135
      %p137 = pneg %p136
      // Predicated region
      $region9: #{tpu_custom_call.1} parent=5 // pred_check
        _
      $region10: #{tpu_custom_call.1} parent=5 // pred_check_branch
        %139 = sbr.rel (%p136) target = $region12
      $region11: #{tpu_custom_call.1} parent=5 // pred_region
        %s140 = ssub.s32 %s16, 1
        // Predicated region
        $region13: #{tpu_custom_call.1} parent=11 // pred_check
          %p141 = pneg %p63
        $region14: #{tpu_custom_call.1} parent=11 // pred_check_branch
          %143 = sbr.rel (%p141) target = $region16
        $region15: #{tpu_custom_call.1} parent=11 // pred_region
          _
        $region16: #{tpu_custom_call.1} parent=11 // pred_fallthru
          _
        // Predicated region
        $region17: #{tpu_custom_call.1} parent=11 // pred_check
          %p144 = pneg %p84
        $region18: #{tpu_custom_call.1} parent=11 // pred_check_branch
          %146 = sbr.rel (%p144) target = $region20
        $region19: #{tpu_custom_call.1} parent=11 // pred_region
          _
        $region20: #{tpu_custom_call.1} parent=11 // pred_fallthru
          _
      $region12: #{tpu_custom_call.1} parent=5 // pred_fallthru
        _
      %p147 = scmp.lt.s32.totalorder %s16, 8
      // Predicated region
      $region21: #{tpu_custom_call.1} parent=5 // pred_check
        %p148 = pneg %p147
      $region22: #{tpu_custom_call.1} parent=5 // pred_check_branch
        %150 = sbr.rel (%p148) target = $region24
      $region23: #{tpu_custom_call.1} parent=5 // pred_region
        // Predicated region
        $region25: #{tpu_custom_call.1} parent=23 // pred_check
          %p151 = pneg %p36
        $region26: #{tpu_custom_call.1} parent=23 // pred_check_branch
          %153 = sbr.rel (%p151) target = $region28
        $region27: #{tpu_custom_call.1} parent=23 // pred_region
          %s154 = sand.u32 %s26, 1
          %s155 = scalar_lea.sflag [#allocation5], %s154
          %s156 = sand.u32 %s26, 1
          %s157 = smul.addr %s156, 64
          %s158 = scalar_lea.vmem [#allocation4], %s157
          %s159 = smul.u32 8, %s16
          %s161 = ssub.s32 1024, 1024
          %162 = vsyncadd %s155, %s161
          %s163 = smul.addr %s159, 128
          %s164 = scalar_lea.hbm %s0, %s163
          %s165 = sshll.u32 %s158, 4
          %s166 = int_to_ptr.vmem [resolvable:$true] %s165
          %171 = dma.hbm_to_vmem [thread:$0]  %s164, 1024, %s166, %s155, 128, 128, 8
        $region28: #{tpu_custom_call.1} parent=23 // pred_fallthru
          _
      $region24: #{tpu_custom_call.1} parent=5 // pred_fallthru
        _
      %p172 = scmp.le.s32.totalorder 1, %s16
      %p173 = scmp.lt.s32.totalorder %s16, 9
      %p174 = pnand %p172, %p173
      %p175 = pneg %p174
      // Predicated region
      $region29: #{tpu_custom_call.1} parent=5 // pred_check
        _
      $region30: #{tpu_custom_call.1} parent=5 // pred_check_branch
        %177 = sbr.rel (%p174) target = $region32
      $region31: #{tpu_custom_call.1} parent=5 // pred_region
        %s178 = ssub.s32 %s16, 1
        %s179 = sand.u32 %s29, 1
        %s180 = scalar_lea.sflag [#allocation5], %s179
        %s181 = sand.u32 %s29, 1
        %s182 = smul.addr %s181, 64
        %s183 = scalar_lea.vmem [#allocation4], %s182
        // Predicated region
        $region33: #{tpu_custom_call.1} parent=31 // pred_check
          %p184 = pneg %p42
        $region34: #{tpu_custom_call.1} parent=31 // pred_check_branch
          %186 = sbr.rel (%p184) target = $region36
        $region35: #{tpu_custom_call.1} parent=31 // pred_region
          %187 = dma.done %s180, 1024
        $region36: #{tpu_custom_call.1} parent=31 // pred_fallthru
          _
        %s188 = sand.u32 %s29, 1
        %s189 = scalar_lea.sflag [#allocation5], %s188
        %s190 = sand.u32 %s29, 1
        %s191 = smul.addr %s190, 64
        %s192 = scalar_lea.vmem [#allocation4], %s191
        %p193 = pneg %p42
        %p194 = pneg %p39
        %p195 = pneg %p63
        %p196 = pneg %p60
        %p197 = pneg %p84
        %p198 = pneg %p81
        %p199 = pneg %p105
        %p200 = pneg %p102
        %p201 = pneg %p126
        %p202 = pneg %p123
        %s203 = smul.u32 8, %s21
        %p204 = scmp.eq.s32.totalorder %s21, 0
        // Predicated region
        $region37: #{tpu_custom_call.1} parent=31 // pred_check
          %p205 = pneg %p204
        $region38: #{tpu_custom_call.1} parent=31 // pred_check_branch
          %207 = sbr.rel (%p205) target = $region40
        $region39: #{tpu_custom_call.1} parent=31 // pred_region
          %208 = vst [vmem:[#allocation2] sm:$0x1] 0.0
          %209 = vst [vmem:[#allocation3] sm:$0x1] 0.0
        $region40: #{tpu_custom_call.1} parent=31 // pred_fallthru
          _
        %v210 = vld [vmem:[%s183] sm:$0xff]
        %v211 = vld [vmem:[%s183 + $0x8] sm:$0xff]
        %v212 = vld [vmem:[%s183 + $0x10] sm:$0xff]
        %v213 = vld [vmem:[%s183 + $0x18] sm:$0xff]
        %v214 = vld [vmem:[%s183 + $0x20] sm:$0xff]
        %v215 = vld [vmem:[%s183 + $0x28] sm:$0xff]
        %v216 = vld [vmem:[%s183 + $0x30] sm:$0xff]
        %v217 = vld [vmem:[%s183 + $0x38] sm:$0xff]
        %v218 = vld [vmem:[#allocation2] sm:$0x1]
        %v219 = vadd.f32 %v210, %v211
        %v220 = vadd.f32 %v219, %v212
        %v221 = vadd.f32 %v220, %v213
        %v222 = vadd.f32 %v221, %v214
        %v223 = vadd.f32 %v222, %v215
        %v224 = vadd.f32 %v223, %v216
        %v225 = vadd.f32 %v224, %v217
        %v226 = vrot.slane %v225, 4
        %v227 = vadd.f32 %v225, %v226
        %v228 = vrot.slane %v227, 2
        %v229 = vadd.f32 %v227, %v228
        %v230 = vrot.slane %v229, 1
        %v231 = vadd.f32 %v229, %v230
        %v232 = vadd.f32 %v218, %v231
        %233 = vst [vmem:[#allocation2] sm:$0x1] %v232
        %v234 = vld [vmem:[#allocation3] sm:$0x1]
        %v235 = vmul.f32 %v210, %v210
        %v236 = vmul.f32 %v211, %v211
        %v237 = vmul.f32 %v212, %v212
        %v238 = vmul.f32 %v213, %v213
        %v239 = vmul.f32 %v214, %v214
        %v240 = vmul.f32 %v215, %v215
        %v241 = vmul.f32 %v216, %v216
        %v242 = vmul.f32 %v217, %v217
        %v243 = vadd.f32 %v235, %v236
        %v244 = vadd.f32 %v243, %v237
        %v245 = vadd.f32 %v244, %v238
        %v246 = vadd.f32 %v245, %v239
        %v247 = vadd.f32 %v246, %v240
        %v248 = vadd.f32 %v247, %v241
        %v249 = vadd.f32 %v248, %v242
        %v250 = vrot.slane %v249, 4
        %v251 = vadd.f32 %v249, %v250
        %v252 = vrot.slane %v251, 2
        %v253 = vadd.f32 %v251, %v252
        %v254 = vrot.slane %v253, 1
        %v255 = vadd.f32 %v253, %v254
        %v256 = vadd.f32 %v234, %v255
        %257 = vst [vmem:[#allocation3] sm:$0x1] %v256
        %p258 = scmp.eq.s32.totalorder %s21, 7
        // Predicated region
        $region41: #{tpu_custom_call.1} parent=31 // pred_check
          %p259 = pneg %p258
        $region42: #{tpu_custom_call.1} parent=31 // pred_check_branch
          %261 = sbr.rel (%p259) target = $region44
        $region43: #{tpu_custom_call.1} parent=31 // pred_region
          %v262 = vld [vmem:[#allocation2] sm:$0x1]
          %v263 = vmul.f32 %v262, 0.001953125
          %v264 = vld [vmem:[#allocation3] sm:$0x1]
          %v265 = vmul.f32 %v264, 0.001953125
          %v266 = vmul.f32 %v263, %v263
          %v267 = vsub.f32 %v265, %v266
          %v268 = vmax.f32 %v267, 0.0
          %v269 = vadd.f32 %v268, 1e-05
          %v270 = vrsqrt.pop %v269
          %v271 = vld [vmem:[%s1] sm:$0x1]
          %v272 = vmul.f32 %v271, %v270
          %273 = vst [vmem:[#allocation7] sm:$0x1] %v272
          %v274 = vld [vmem:[%s2] sm:$0x1]
          %v275 = vmul.f32 %v263, %v272
          %v276 = vsub.f32 %v274, %v275
          %277 = vst [vmem:[#allocation8] sm:$0x1] %v276
        $region44: #{tpu_custom_call.1} parent=31 // pred_fallthru
          _
        // Predicated region
        $region45: #{tpu_custom_call.1} parent=31 // pred_check
          %p278 = pneg %p102
        $region46: #{tpu_custom_call.1} parent=31 // pred_check_branch
          %280 = sbr.rel (%p278) target = $region48
        $region47: #{tpu_custom_call.1} parent=31 // pred_region
          %s282 = ssub.s32 16, 16
          %283 = vsyncadd [#allocation6], %s282
          %s285 = sshll.u32 [#allocation7], 4
          %s286 = int_to_ptr.vmem [resolvable:$true] %s285
          %288 = dma.vmem_to_hbm [thread:$0]  %s286, 16, %s3, [#allocation6]
        $region48: #{tpu_custom_call.1} parent=31 // pred_fallthru
          _
        // Predicated region
        $region49: #{tpu_custom_call.1} parent=31 // pred_check
          %p289 = pneg %p123
        $region50: #{tpu_custom_call.1} parent=31 // pred_check_branch
          %291 = sbr.rel (%p289) target = $region52
        $region51: #{tpu_custom_call.1} parent=31 // pred_region
          %s293 = ssub.s32 16, 16
          %294 = vsyncadd [#allocation9], %s293
          %s296 = sshll.u32 [#allocation8], 4
          %s297 = int_to_ptr.vmem [resolvable:$true] %s296
          %299 = dma.vmem_to_hbm [thread:$0]  %s297, 16, %s4, [#allocation9]
        $region52: #{tpu_custom_call.1} parent=31 // pred_fallthru
          _
        // Predicated region
        $region53: #{tpu_custom_call.1} parent=31 // pred_check
          %p300 = pneg %p102
        $region54: #{tpu_custom_call.1} parent=31 // pred_check_branch
          %302 = sbr.rel (%p300) target = $region56
        $region55: #{tpu_custom_call.1} parent=31 // pred_region
          %303 = dma.done [#allocation6], 16
        $region56: #{tpu_custom_call.1} parent=31 // pred_fallthru
          _
        // Predicated region
        $region57: #{tpu_custom_call.1} parent=31 // pred_check
          %p304 = pneg %p123
        $region58: #{tpu_custom_call.1} parent=31 // pred_check_branch
          %306 = sbr.rel (%p304) target = $region60
        $region59: #{tpu_custom_call.1} parent=31 // pred_region
          %307 = dma.done [#allocation9], 16
        $region60: #{tpu_custom_call.1} parent=31 // pred_fallthru
          _
      $region32: #{tpu_custom_call.1} parent=5 // pred_fallthru
        _
      %p308 = scmp.le.s32.totalorder 2, %s16
      // Predicated region
      $region61: #{tpu_custom_call.1} parent=5 // pred_check
        %p309 = pneg %p308
      $region62: #{tpu_custom_call.1} parent=5 // pred_check_branch
        %311 = sbr.rel (%p309) target = $region64
      $region63: #{tpu_custom_call.1} parent=5 // pred_region
        %s312 = ssub.s32 %s16, 2
      $region64: #{tpu_custom_call.1} parent=5 // pred_fallthru
        _
    $region6: #{tpu_custom_call.1} parent=1 // loop_footer
      %s20 = sadd.s32 1, %s16
    $region7: #{tpu_custom_call.1} parent=1 // loop_footer_branch
      %15 = sbr.rel target = $region3
    $region8: #{tpu_custom_call.1} parent=1 // loop_exit
      _
    %313 = vsyncpa [#allocation5], 1
    %s314 = scalar_lea.sflag [#allocation5], 1
    %315 = vsyncpa %s314, 1
    %316 = vsyncpa [#allocation6], 1
    %s317 = scalar_lea.sflag [#allocation6], 1
    %318 = vsyncpa %s317, 1
    %319 = vsyncpa [#allocation9], 1

</llo_original>
